<compile_context>
chip_gen: v5e
topology: v5e:2x2
jax: 0.10.0
libtpu: 0.0.40
codegen_flags: <defaults>
</compile_context>

<pallas_src>
import jax
import jax.numpy as jnp
from jax.experimental import pallas as pl
from jax.experimental.pallas import tpu as pltpu


def _interpolator_kernel(x_ref, w_ref, b_ref, o_ref):
    # x_ref: (TB, L*F)   batch-row tile, flattened (l, f) on the lane axis
    # w_ref: (L*F, T*G)  fused (sequence x feature) weight
    # b_ref: (1, T*G)    fused bias
    # o_ref: (TB, T*G)
    acc = jnp.dot(x_ref[...], w_ref[...], preferred_element_type=jnp.float32)
    o_ref[...] = (acc + b_ref[...]).astype(o_ref.dtype)


def interpolator_forward(x, w_seq, b_seq, w_feat, b_feat,
                         *, compute_dtype=None, row_tile=512):
    """x: (B, L_vis, F) -> (B, T, F).   w_seq: (T, L_vis), w_feat: (G, F), G == F."""
    B, L, F = x.shape
    T, Lw = w_seq.shape
    G, Fw = w_feat.shape
    assert Lw == L and Fw == F
    out_dtype = x.dtype

    LF, TG = L * F, T * G

    ws32 = w_seq.astype(jnp.float32)
    wf32 = w_feat.astype(jnp.float32)

    # Fused weight: W_comb[l*F+f, t*G+g] = W_seq[t,l] * W_feat[g,f]
    w_comb = jnp.einsum("tl,gf->lftg", ws32, wf32).reshape(LF, TG)
    # Fused bias:   b_comb[t*G+g] = b_seq[t] * sum_f W_feat[g,f] + b_feat[g]
    b_comb = (b_seq.astype(jnp.float32)[:, None] * jnp.sum(wf32, axis=1)[None, :]
              + b_feat.astype(jnp.float32)[None, :]).reshape(1, TG)

    x_flat = x.reshape(B, LF)                      # contiguous reshape -> free

    if compute_dtype is not None:
        x_flat = x_flat.astype(compute_dtype)
        w_comb = w_comb.astype(compute_dtype)

    # Row tiling over the batch: single full-array block for small B (no (8,128)
    # constraint when the block equals the array dims); otherwise pad to a multiple
    # of an 8-aligned tile and shard tiles across the "parallel" grid axis.
    if B <= row_tile:
        nt, tb, b_pad = 1, B, B
    else:
        tb = -(-row_tile // 8) * 8
        b_pad = -(-B // tb) * tb
        nt = b_pad // tb
        if b_pad != B:
            x_flat = jnp.pad(x_flat, ((0, b_pad - B), (0, 0)))

    cost = pl.CostEstimate(
        flops=2 * b_pad * LF * TG,
        transcendentals=0,
        bytes_accessed=int(x_flat.size * x_flat.dtype.itemsize
                           + w_comb.size * w_comb.dtype.itemsize
                           + b_comb.size * b_comb.dtype.itemsize
                           + b_pad * TG * jnp.dtype(out_dtype).itemsize),
    )

    y_flat = pl.pallas_call(
        _interpolator_kernel,
        out_shape=jax.ShapeDtypeStruct((b_pad, TG), out_dtype),
        grid_spec=pltpu.PrefetchScalarGridSpec(
            num_scalar_prefetch=0,
            grid=(nt,),
            in_specs=[
                pl.BlockSpec((tb, LF), lambda n: (n, 0)),
                pl.BlockSpec((LF, TG), lambda n: (0, 0)),   # resident across steps
                pl.BlockSpec((1, TG), lambda n: (0, 0)),    # resident across steps
            ],
            out_specs=pl.BlockSpec((tb, TG), lambda n: (n, 0)),
        ),
        compiler_params=pltpu.CompilerParams(
            dimension_semantics=("parallel",)),
        cost_estimate=cost,
    )(x_flat, w_comb, b_comb)

    return y_flat[:B].reshape(B, T, G)


def _reference(x, w_seq, b_seq, w_feat, b_feat):
    # pure-JAX reference, same math as the PyTorch forward
    xt = jnp.swapaxes(x, 1, 2)                         # (B, F, L)
    h = jnp.einsum("bfl,tl->bft", xt, w_seq) + b_seq   # (B, F, T)
    h = jnp.swapaxes(h, 1, 2)                          # (B, T, F)
    return jnp.einsum("btf,gf->btg", h, w_feat) + b_feat


if __name__ == "__main__":
    # cfg defaults from the module docstring
    ts_size = 24
    total_mask_size = 3
    hidden_dim = 12
    vis_size = ts_size - total_mask_size
    batch = 2

    key = jax.random.PRNGKey(0)
    k_x, k_w1, k_b1, k_w2, k_b2, k_x2 = jax.random.split(key, 6)

    # deterministic "nn.Linear"-style init (uniform in +-1/sqrt(fan_in))
    lim1 = 1.0 / jnp.sqrt(vis_size)
    lim2 = 1.0 / jnp.sqrt(hidden_dim)
    w_seq = jax.random.uniform(k_w1, (ts_size, vis_size), jnp.float32, -lim1, lim1)
    b_seq = jax.random.uniform(k_b1, (ts_size,), jnp.float32, -lim1, lim1)
    w_feat = jax.random.uniform(k_w2, (hidden_dim, hidden_dim), jnp.float32, -lim2, lim2)
    b_feat = jax.random.uniform(k_b2, (hidden_dim,), jnp.float32, -lim2, lim2)

    x = jax.random.normal(k_x, (batch, vis_size, hidden_dim), jnp.float32)
    ref = _reference(x, w_seq, b_seq, w_feat, b_feat)

    # f32 compute path (tight check), single-tile grid
    out = interpolator_forward(x, w_seq, b_seq, w_feat, b_feat)
    out = jax.block_until_ready(out)
    assert out.shape == (batch, ts_size, hidden_dim)
    assert jnp.allclose(out, ref, atol=1e-4, rtol=1e-4)

    # bf16 MXU path (v6e/v7x throughput), f32 accumulation inside the kernel
    out_bf16 = interpolator_forward(x, w_seq, b_seq, w_feat, b_feat,
                                    compute_dtype=jnp.bfloat16)
    out_bf16 = jax.block_until_ready(out_bf16)
    assert out_bf16.shape == (batch, ts_size, hidden_dim)
    assert jnp.allclose(out_bf16.astype(jnp.float32), ref, atol=5e-2, rtol=5e-2)

    # multi-tile path: batch large enough to force padding + >1 grid steps
    big_b = 1100
    x_big = jax.random.normal(k_x2, (big_b, vis_size, hidden_dim), jnp.float32)
    ref_big = _reference(x_big, w_seq, b_seq, w_feat, b_feat)
    out_big = interpolator_forward(x_big, w_seq, b_seq, w_feat, b_feat)
    out_big = jax.block_until_ready(out_big)
    assert out_big.shape == (big_b, ts_size, hidden_dim)
    assert jnp.allclose(out_big, ref_big, atol=1e-4, rtol=1e-4)

    print("KERNEL_OK")
</pallas_src>

<mosaic_0001>
module attributes {stable_mosaic.version = 11 : i64} {
  func.func @_interpolator_kernel(%arg0: i32, %arg1: memref<2x252xf32, #tpu.memory_space<vmem>>, %arg2: memref<252x288xf32, #tpu.memory_space<vmem>>, %arg3: memref<1x288xf32, #tpu.memory_space<vmem>>, %arg4: memref<2x288xf32, #tpu.memory_space<vmem>>) attributes {dimension_semantics = [#tpu.dimension_semantics<parallel>], iteration_bounds = array<i64: 1>, scalar_prefetch = 0 : i64, scratch_operands = 0 : i64, tpu.core_type = #tpu.core_type<tc>, window_params = [{transform_indices = @transform_0, window_bounds = array<i64: 2, 252>}, {pipeline_mode = #tpu.pipeline_mode<synchronous>, transform_indices = @transform_1, window_bounds = array<i64: 252, 288>}, {pipeline_mode = #tpu.pipeline_mode<synchronous>, transform_indices = @transform_2, window_bounds = array<i64: 1, 288>}, {transform_indices = @transform_3, window_bounds = array<i64: 2, 288>}]} {
    %c0 = arith.constant 0 : index
    %c0_0 = arith.constant 0 : index
    %0 = vector.load %arg1[%c0, %c0_0] : memref<2x252xf32, #tpu.memory_space<vmem>>, vector<2x252xf32>
    %c0_1 = arith.constant 0 : index
    %c0_2 = arith.constant 0 : index
    %1 = vector.load %arg2[%c0_1, %c0_2] : memref<252x288xf32, #tpu.memory_space<vmem>>, vector<252x288xf32>
    %cst = arith.constant dense<0.000000e+00> : vector<2x288xf32>
    %2 = tpu.matmul %0, %1, %cst {dimension_numbers = #tpu.dot_dimension_numbers<[1], [0], [0], [1], [0, 0, 1, 1], [], []>} : vector<2x252xf32>, vector<252x288xf32>, vector<2x288xf32> -> vector<2x288xf32>
    %c0_3 = arith.constant 0 : index
    %c0_4 = arith.constant 0 : index
    %3 = vector.load %arg3[%c0_3, %c0_4] : memref<1x288xf32, #tpu.memory_space<vmem>>, vector<1x288xf32>
    %4 = vector.broadcast %3 : vector<1x288xf32> to vector<2x288xf32>
    %5 = arith.addf %2, %4 : vector<2x288xf32>
    %c0_5 = arith.constant 0 : index
    %c0_6 = arith.constant 0 : index
    %6 = vector.load %arg4[%c0_5, %c0_6] : memref<2x288xf32, #tpu.memory_space<vmem>>, vector<2x288xf32>
    tpu.vector_store %arg4[%c0_5, %c0_6], %5 {strides = array<i32>} : memref<2x288xf32, #tpu.memory_space<vmem>>, vector<2x288xf32>,
    return
  }
  func.func @transform_0(%arg0: i32) -> (i32, i32) {
    %c0_i32 = arith.constant 0 : i32
    %c0_i32_0 = arith.constant 0 : i32
    return %arg0, %c0_i32 : i32, i32
  }
  func.func @transform_1(%arg0: i32) -> (i32, i32) {
    %c0_i32 = arith.constant 0 : i32
    %c0_i32_0 = arith.constant 0 : i32
    %c0_i32_1 = arith.constant 0 : i32
    return %c0_i32, %c0_i32_0 : i32, i32
  }
  func.func @transform_2(%arg0: i32) -> (i32, i32) {
    %c0_i32 = arith.constant 0 : i32
    %c0_i32_0 = arith.constant 0 : i32
    %c0_i32_1 = arith.constant 0 : i32
    return %c0_i32, %c0_i32_0 : i32, i32
  }
  func.func @transform_3(%arg0: i32) -> (i32, i32) {
    %c0_i32 = arith.constant 0 : i32
    %c0_i32_0 = arith.constant 0 : i32
    return %arg0, %c0_i32 : i32, i32
  }
}

</mosaic_0001>

<llo_original>
// kernel: tpu_custom_call.1
$region0: #{tpu_custom_call.1}
  #allocation0 [shape = 'u32[]', space=smem, size = 0x4, offset = 0x4, fixed_abs, tag = 'smem constant byte address 0x4 - core index']
  #allocation1 [shape = 'u32[72,128]{1,0:T(1,128)}', space=vmem, size = 0x9000, scoped, tag = 'internal scratch']
  %s0 = inlined_call_operand.vmem [shape: f32[2,252], index: 0, kind: input, shape index: {}]
  %s1 = inlined_call_operand.vmem [shape: f32[252,288], index: 1, kind: input, shape index: {}]
  %s2 = inlined_call_operand.vmem [shape: f32[1,288], index: 2, kind: input, shape index: {}]
  %s3 = inlined_call_operand.hbm [shape: f32[2,288], index: 3, kind: output, shape index: {}]
  %s4 = sld [smem:[#allocation0]]
  $region22: #{tpu_custom_call.1} parent=0
    _
  %s6 = ssub.s32 1, %s4
  %s7 = scalar_select 0, %s6, %s4
  $region1: #{tpu_custom_call.1} parent=0
    #allocation2 [shape = 'u8[3072]{0}', space=vmem, size = 0xc00, scoped, tag = 'output window, operand 0, single buffered']
    #allocation3 [shape = 's32[1]{0}', space=sflag, size = 0x4, scoped, tag = 'scoped memory for tpu_custom_call.1']
    %8 = vsyncpa [#allocation3], 0
    // Predicated region
    $region2: #{tpu_custom_call.1} parent=1 // pred_check
      _
    $region3: #{tpu_custom_call.1} parent=1 // pred_check_branch
      %10 = sbr.rel (0) target = $region5
    $region4: #{tpu_custom_call.1} parent=1 // pred_region
      _
    $region5: #{tpu_custom_call.1} parent=1 // pred_fallthru
      _
    // Predicated region
    $region6: #{tpu_custom_call.1} parent=1 // pred_check
      _
    $region7: #{tpu_custom_call.1} parent=1 // pred_check_branch
      %12 = sbr.rel (0) target = $region9
    $region8: #{tpu_custom_call.1} parent=1 // pred_region
      _
    $region9: #{tpu_custom_call.1} parent=1 // pred_fallthru
      _
    // Predicated region
    $region10: #{tpu_custom_call.1} parent=1 // pred_check
      _
    $region11: #{tpu_custom_call.1} parent=1 // pred_check_branch
      %14 = sbr.rel (0) target = $region13
    $region12: #{tpu_custom_call.1} parent=1 // pred_region
      _
    $region13: #{tpu_custom_call.1} parent=1 // pred_fallthru
      _
    %v15 = vld [vmem:[%s0] sm:$0xf]
    %v16 = vld [vmem:[%s1] sm:$0xff]
    %v17 = vld [vmem:[%s1 + $0x8] sm:$0xff]
    %v18 = vld [vmem:[%s1 + $0x10] sm:$0xff]
    %v19 = vld [vmem:[%s1 + $0x18] sm:$0xff]
    %v20 = vld [vmem:[%s1 + $0x20] sm:$0xff]
    %v21 = vld [vmem:[%s1 + $0x28] sm:$0xff]
    %v22 = vld [vmem:[%s1 + $0x30] sm:$0xff]
    %v23 = vld [vmem:[%s1 + $0x38] sm:$0xff]
    %v24 = vld [vmem:[%s1 + $0x40] sm:$0xff]
    %v25 = vld [vmem:[%s1 + $0x48] sm:$0xff]
    %v26 = vld [vmem:[%s1 + $0x50] sm:$0xff]
    %v27 = vld [vmem:[%s1 + $0x58] sm:$0xff]
    %v28 = vld [vmem:[%s1 + $0x60] sm:$0xff]
    %v29 = vld [vmem:[%s1 + $0x68] sm:$0xff]
    %v30 = vld [vmem:[%s1 + $0x70] sm:$0xff]
    %v31 = vld [vmem:[%s1 + $0x78] sm:$0xff]
    %v32 = vld [vmem:[%s1 + $0x80] sm:$0xff]
    %v33 = vld [vmem:[%s1 + $0x88] sm:$0xff]
    %v34 = vld [vmem:[%s1 + $0x90] sm:$0xff]
    %v35 = vld [vmem:[%s1 + $0x98] sm:$0xff]
    %v36 = vld [vmem:[%s1 + $0xa0] sm:$0xff]
    %v37 = vld [vmem:[%s1 + $0xa8] sm:$0xff]
    %v38 = vld [vmem:[%s1 + $0xb0] sm:$0xff]
    %v39 = vld [vmem:[%s1 + $0xb8] sm:$0xff]
    %v40 = vld [vmem:[%s1 + $0xc0] sm:$0xff]
    %v41 = vld [vmem:[%s1 + $0xc8] sm:$0xff]
    %v42 = vld [vmem:[%s1 + $0xd0] sm:$0xff]
    %v43 = vld [vmem:[%s1 + $0xd8] sm:$0xff]
    %v44 = vld [vmem:[%s1 + $0xe0] sm:$0xff]
    %v45 = vld [vmem:[%s1 + $0xe8] sm:$0xff]
    %v46 = vld [vmem:[%s1 + $0xf0] sm:$0xff]
    %v47 = vld [vmem:[%s1 + $0xf8] sm:$0xff]
    %v48 = vld [vmem:[%s1 + $0x100] sm:$0xff]
    %v49 = vld [vmem:[%s1 + $0x108] sm:$0xff]
    %v50 = vld [vmem:[%s1 + $0x110] sm:$0xff]
    %v51 = vld [vmem:[%s1 + $0x118] sm:$0xff]
    %v52 = vld [vmem:[%s1 + $0x120] sm:$0xff]
    %v53 = vld [vmem:[%s1 + $0x128] sm:$0xff]
    %v54 = vld [vmem:[%s1 + $0x130] sm:$0xff]
    %v55 = vld [vmem:[%s1 + $0x138] sm:$0xff]
    %v56 = vld [vmem:[%s1 + $0x140] sm:$0xff]
    %v57 = vld [vmem:[%s1 + $0x148] sm:$0xff]
    %v58 = vld [vmem:[%s1 + $0x150] sm:$0xff]
    %v59 = vld [vmem:[%s1 + $0x158] sm:$0xff]
    %v60 = vld [vmem:[%s1 + $0x160] sm:$0xff]
    %v61 = vld [vmem:[%s1 + $0x168] sm:$0xff]
    %v62 = vld [vmem:[%s1 + $0x170] sm:$0xff]
    %v63 = vld [vmem:[%s1 + $0x178] sm:$0xff]
    %v64 = vld [vmem:[%s1 + $0x180] sm:$0xff]
    %v65 = vld [vmem:[%s1 + $0x188] sm:$0xff]
    %v66 = vld [vmem:[%s1 + $0x190] sm:$0xff]
    %v67 = vld [vmem:[%s1 + $0x198] sm:$0xff]
    %v68 = vld [vmem:[%s1 + $0x1a0] sm:$0xff]
    %v69 = vld [vmem:[%s1 + $0x1a8] sm:$0xff]
    %v70 = vld [vmem:[%s1 + $0x1b0] sm:$0xff]
    %v71 = vld [vmem:[%s1 + $0x1b8] sm:$0xff]
    %v72 = vld [vmem:[%s1 + $0x1c0] sm:$0xff]
    %v73 = vld [vmem:[%s1 + $0x1c8] sm:$0xff]
    %v74 = vld [vmem:[%s1 + $0x1d0] sm:$0xff]
    %v75 = vld [vmem:[%s1 + $0x1d8] sm:$0xff]
    %v76 = vld [vmem:[%s1 + $0x1e0] sm:$0xff]
    %v77 = vld [vmem:[%s1 + $0x1e8] sm:$0xff]
    %v78 = vld [vmem:[%s1 + $0x1f0] sm:$0xff]
    %v79 = vld [vmem:[%s1 + $0x1f8] sm:$0xff]
    %v80 = vld [vmem:[%s1 + $0x200] sm:$0xff]
    %v81 = vld [vmem:[%s1 + $0x208] sm:$0xff]
    %v82 = vld [vmem:[%s1 + $0x210] sm:$0xff]
    %v83 = vld [vmem:[%s1 + $0x218] sm:$0xff]
    %v84 = vld [vmem:[%s1 + $0x220] sm:$0xff]
    %v85 = vld [vmem:[%s1 + $0x228] sm:$0xff]
    %v86 = vld [vmem:[%s1 + $0x230] sm:$0xff]
    %v87 = vld [vmem:[%s1 + $0x238] sm:$0xff]
    %v88 = vld [vmem:[%s1 + $0x240] sm:$0xff]
    %v89 = vld [vmem:[%s1 + $0x248] sm:$0xff]
    %v90 = vld [vmem:[%s1 + $0x250] sm:$0xff]
    %v91 = vld [vmem:[%s1 + $0x258] sm:$0xff]
    %v92 = vld [vmem:[%s1 + $0x260] sm:$0xff]
    %v93 = vld [vmem:[%s1 + $0x268] sm:$0xff]
    %v94 = vld [vmem:[%s1 + $0x270] sm:$0xff]
    %v95 = vld [vmem:[%s1 + $0x278] sm:$0xff]
    %v96 = vld [vmem:[%s1 + $0x280] sm:$0xff]
    %v97 = vld [vmem:[%s1 + $0x288] sm:$0xff]
    %v98 = vld [vmem:[%s1 + $0x290] sm:$0xff]
    %v99 = vld [vmem:[%s1 + $0x298] sm:$0xff]
    %v100 = vld [vmem:[%s1 + $0x2a0] sm:$0xff]
    %v101 = vld [vmem:[%s1 + $0x2a8] sm:$0xff]
    %v102 = vld [vmem:[%s1 + $0x2b0] sm:$0xff]
    %v103 = vld [vmem:[%s1 + $0x2b8] sm:$0xff]
    %v104 = vld [vmem:[%s1 + $0x2c0] sm:$0xff]
    %v105 = vld [vmem:[%s1 + $0x2c8] sm:$0xff]
    %v106 = vld [vmem:[%s1 + $0x2d0] sm:$0xff]
    %v107 = vld [vmem:[%s1 + $0x2d8] sm:$0xff]
    %v108 = vld [vmem:[%s1 + $0x2e0] sm:$0xff]
    %v109 = vld [vmem:[%s1 + $0x2e8] sm:$0xf]
    %v110 = vld [vmem:[%s1 + $0x2f0] sm:$0xf]
    %v111 = vld [vmem:[%s1 + $0x2f8] sm:$0xf]
    %v112 = vld [vmem:[%s2] sm:$0x7]
    %v114 = vperm.slane %v112, 0
    %v115 = vperm.slane %v112, 1
    %v116 = vperm.slane %v112, 2
    %121 = vst [vmem:[#allocation1] ss:$4 sm:$0xff] %v15
    %v122 = vld.sshfl [vmem:[#allocation1] sm:$0xff pattern:$0x73625140]
    %v123 = vld.sshfl [vmem:[#allocation1 + $0x8] sm:$0xff pattern:$0x73625140]
    %vm125 = vcmask 1014784
    %v126 = vsel %vm125, %v123, 0
    %vm128 = vcmask 1043456
    %v130 = vsel %vm128, %v109, 0
    %v133 = vsel %vm128, %v110, 0
    %v136 = vsel %vm128, %v111, 0
    %138 = vmatpush.msra.mxu0 %v61
    %139 = vmatpush.msra.mxu0 %v58
    %140 = vmatpush.msra.mxu0 %v55
    %141 = vmatpush.msra.mxu0 %v52
    %142 = vmatpush.msra.mxu0 %v49
    %143 = vmatpush.msra.mxu0 %v46
    %144 = vmatpush.msra.mxu0 %v43
    %145 = vmatpush.msra.mxu0 %v40
    %146 = vmatpush.msra.mxu0 %v37
    %147 = vmatpush.msra.mxu0 %v34
    %148 = vmatpush.msra.mxu0 %v31
    %149 = vmatpush.msra.mxu0 %v28
    %150 = vmatpush.msra.mxu0 %v25
    %151 = vmatpush.msra.mxu0 %v22
    %152 = vmatpush.msra.mxu0 %v19
    %153 = vmatpush.msra.mxu0 %v16
    %154 = vmatmul.f32.gmra.mxu0 %v122
    %v155 = vpop.f32.mrf.mxu0
    %v156 = vadd.f32 %v114, %v155
    %157 = vdwg.mxu0
    %158 = vmatpush.msra.mxu0 %v130
    %159 = vmatpush.msra.mxu0 %v106
    %160 = vmatpush.msra.mxu0 %v103
    %161 = vmatpush.msra.mxu0 %v100
    %162 = vmatpush.msra.mxu0 %v97
    %163 = vmatpush.msra.mxu0 %v94
    %164 = vmatpush.msra.mxu0 %v91
    %165 = vmatpush.msra.mxu0 %v88
    %166 = vmatpush.msra.mxu0 %v85
    %167 = vmatpush.msra.mxu0 %v82
    %168 = vmatpush.msra.mxu0 %v79
    %169 = vmatpush.msra.mxu0 %v76
    %170 = vmatpush.msra.mxu0 %v73
    %171 = vmatpush.msra.mxu0 %v70
    %172 = vmatpush.msra.mxu0 %v67
    %173 = vmatpush.msra.mxu0 %v64
    %174 = vmatmul.f32.gmra.mxu0 %v126
    %v175 = vpop.f32.mrf.mxu0
    %v176 = vadd.f32 %v156, %v175
    %177 = vdwg.mxu0
    %178 = vmatpush.msra.mxu0 %v62
    %179 = vmatpush.msra.mxu0 %v59
    %180 = vmatpush.msra.mxu0 %v56
    %181 = vmatpush.msra.mxu0 %v53
    %182 = vmatpush.msra.mxu0 %v50
    %183 = vmatpush.msra.mxu0 %v47
    %184 = vmatpush.msra.mxu0 %v44
    %185 = vmatpush.msra.mxu0 %v41
    %186 = vmatpush.msra.mxu0 %v38
    %187 = vmatpush.msra.mxu0 %v35
    %188 = vmatpush.msra.mxu0 %v32
    %189 = vmatpush.msra.mxu0 %v29
    %190 = vmatpush.msra.mxu0 %v26
    %191 = vmatpush.msra.mxu0 %v23
    %192 = vmatpush.msra.mxu0 %v20
    %193 = vmatpush.msra.mxu0 %v17
    %194 = vmatmul.f32.gmra.mxu0 %v122
    %v195 = vpop.f32.mrf.mxu0
    %v196 = vadd.f32 %v115, %v195
    %197 = vdwg.mxu0
    %198 = vmatpush.msra.mxu0 %v133
    %199 = vmatpush.msra.mxu0 %v107
    %200 = vmatpush.msra.mxu0 %v104
    %201 = vmatpush.msra.mxu0 %v101
    %202 = vmatpush.msra.mxu0 %v98
    %203 = vmatpush.msra.mxu0 %v95
    %204 = vmatpush.msra.mxu0 %v92
    %205 = vmatpush.msra.mxu0 %v89
    %206 = vmatpush.msra.mxu0 %v86
    %207 = vmatpush.msra.mxu0 %v83
    %208 = vmatpush.msra.mxu0 %v80
    %209 = vmatpush.msra.mxu0 %v77
    %210 = vmatpush.msra.mxu0 %v74
    %211 = vmatpush.msra.mxu0 %v71
    %212 = vmatpush.msra.mxu0 %v68
    %213 = vmatpush.msra.mxu0 %v65
    %214 = vmatmul.f32.gmra.mxu0 %v126
    %v215 = vpop.f32.mrf.mxu0
    %v216 = vadd.f32 %v196, %v215
    %217 = vdwg.mxu0
    %218 = vmatpush.msra.mxu0 %v63
    %219 = vmatpush.msra.mxu0 %v60
    %220 = vmatpush.msra.mxu0 %v57
    %221 = vmatpush.msra.mxu0 %v54
    %222 = vmatpush.msra.mxu0 %v51
    %223 = vmatpush.msra.mxu0 %v48
    %224 = vmatpush.msra.mxu0 %v45
    %225 = vmatpush.msra.mxu0 %v42
    %226 = vmatpush.msra.mxu0 %v39
    %227 = vmatpush.msra.mxu0 %v36
    %228 = vmatpush.msra.mxu0 %v33
    %229 = vmatpush.msra.mxu0 %v30
    %230 = vmatpush.msra.mxu0 %v27
    %231 = vmatpush.msra.mxu0 %v24
    %232 = vmatpush.msra.mxu0 %v21
    %233 = vmatpush.msra.mxu0 %v18
    %234 = vmatmul.f32.gmra.mxu0 %v122
    %v235 = vpop.f32.mrf.mxu0
    %v236 = vadd.f32 %v116, %v235
    %237 = vdwg.mxu0
    %238 = vmatpush.msra.mxu0 %v136
    %239 = vmatpush.msra.mxu0 %v108
    %240 = vmatpush.msra.mxu0 %v105
    %241 = vmatpush.msra.mxu0 %v102
    %242 = vmatpush.msra.mxu0 %v99
    %243 = vmatpush.msra.mxu0 %v96
    %244 = vmatpush.msra.mxu0 %v93
    %245 = vmatpush.msra.mxu0 %v90
    %246 = vmatpush.msra.mxu0 %v87
    %247 = vmatpush.msra.mxu0 %v84
    %248 = vmatpush.msra.mxu0 %v81
    %249 = vmatpush.msra.mxu0 %v78
    %250 = vmatpush.msra.mxu0 %v75
    %251 = vmatpush.msra.mxu0 %v72
    %252 = vmatpush.msra.mxu0 %v69
    %253 = vmatpush.msra.mxu0 %v66
    %254 = vmatmul.f32.gmra.mxu0 %v126
    %v255 = vpop.f32.mrf.mxu0
    %v256 = vadd.f32 %v236, %v255
    %257 = vdwg.mxu0
    %v261 = vrot.slane %v216, 6
    %v262 = vrot.slane %v256, 4
    %vm263 = vcmask 1041408
    %v264 = vsel %vm263, %v176, %v261
    %v265 = vsel %vm128, %v264, %v262
    %vm267 = vcmask 1043458
    %vm268 = vmor %vm267, %vm263
    %vm269 = vcmask 259076
    %vm270 = vmor %vm269, %vm268
    %271 = vst.msk [vmem:[#allocation2] sm:$0x3f] %vm270, %v265
    // Predicated region
    $region14: #{tpu_custom_call.1} parent=1 // pred_check
      _
    $region15: #{tpu_custom_call.1} parent=1 // pred_check_branch
      %273 = sbr.rel (0) target = $region17
    $region16: #{tpu_custom_call.1} parent=1 // pred_region
      %275 = vsyncadd [#allocation3], 0
      %s277 = sshll.u32 [#allocation2], 4
      %s278 = int_to_ptr.vmem [resolvable:$true] %s277
      %s279 = sshll.u32 %s3, 4
      %s280 = int_to_ptr.hbm [resolvable:$true] %s279
      %282 = dma.vmem_to_hbm [thread:$0]  %s278, 96, %s280, [#allocation3]
    $region17: #{tpu_custom_call.1} parent=1 // pred_fallthru
      _
    // Predicated region
    $region18: #{tpu_custom_call.1} parent=1 // pred_check
      _
    $region19: #{tpu_custom_call.1} parent=1 // pred_check_branch
      %284 = sbr.rel (0) target = $region21
    $region20: #{tpu_custom_call.1} parent=1 // pred_region
      %286 = dma.done [#allocation3], 96
    $region21: #{tpu_custom_call.1} parent=1 // pred_fallthru
      _
    %287 = vsyncpa [#allocation3], 1

</llo_original>
